<compile_context>
chip_gen: v7x
topology: tpu7x:2x2x1
jax: 0.10.0
libtpu: 0.0.40
codegen_flags: <defaults>
</compile_context>

<pallas_src>
import functools

import jax
import jax.numpy as jnp
from jax import lax
from jax.experimental import pallas as pl
from jax.experimental.pallas import tpu as pltpu


# ---------------------------------------------------------------------------
# in-kernel helpers
# ---------------------------------------------------------------------------
def _ce_rows(x_ref, onehot, valid):
    """Masked per-row cross entropy: logsumexp(x) - x[label]; zeros for pad rows.

    bf16 inputs are kept in bf16 through the subtract/exp (no full-tile f32
    widen); lane reductions accumulate in f32; only (tb,1) results are widened.
    """
    x = x_ref[...]
    if x.dtype != jnp.float32 and x.dtype != jnp.bfloat16:
        x = x.astype(jnp.float32)
    m = jnp.max(x, axis=1, keepdims=True)                        # (tb,1) native
    p = jnp.exp(x - m)                                           # native dtype
    denom = jnp.sum(p, axis=1, keepdims=True, dtype=jnp.float32)
    lse = m.astype(jnp.float32) + jnp.log(denom)                 # (tb,1) f32
    x_lab = jnp.sum(jnp.where(onehot, x, 0), axis=1, keepdims=True,
                    dtype=jnp.float32)                           # (tb,1) f32
    return jnp.where(valid, lse - x_lab, 0.0)                    # (tb,1) f32


def _step_masks(tgt_ref, tb, c, gblk, tile_b, total_b):
    """One-hot label mask and valid-row mask, computed once per grid step."""
    tgt = tgt_ref[...]                                           # (tb,1) int32
    col = lax.broadcasted_iota(jnp.int32, (tb, c), 1)
    onehot = col == tgt
    row = lax.broadcasted_iota(jnp.int32, (tb, 1), 0) + gblk * tile_b
    valid = row < total_b
    return onehot, valid


# ---------------------------------------------------------------------------
# kernels
# ---------------------------------------------------------------------------
def _ce_eval_kernel(logits_ref, tgt_ref, out_ref, acc_ref, *, total_b, tile_b):
    i = pl.program_id(1)                                         # reduction step
    gblk = pl.program_id(0) * pl.num_programs(1) + i             # global row-block

    @pl.when(i == 0)
    def _init():
        acc_ref[...] = jnp.zeros_like(acc_ref)

    tb, c = logits_ref.shape
    onehot, valid = _step_masks(tgt_ref, tb, c, gblk, tile_b, total_b)

    ce = _ce_rows(logits_ref, onehot, valid)
    acc_ref[...] += jnp.sum(ce, axis=0, keepdims=True)

    @pl.when(i == pl.num_programs(1) - 1)
    def _finalize():
        out_ref[...] = acc_ref[...].reshape(out_ref.shape)       # per-core partial


def _inception_train_kernel(aux1_ref, aux2_ref, main_ref, tgt_ref,
                            out_ref, acc_ref, *, total_b, tile_b, aux_weight):
    i = pl.program_id(1)
    gblk = pl.program_id(0) * pl.num_programs(1) + i

    @pl.when(i == 0)
    def _init():
        acc_ref[...] = jnp.zeros_like(acc_ref)

    tb, c = main_ref.shape
    onehot, valid = _step_masks(tgt_ref, tb, c, gblk, tile_b, total_b)

    ce_main = _ce_rows(main_ref, onehot, valid)
    ce_a1 = _ce_rows(aux1_ref, onehot, valid)
    ce_a2 = _ce_rows(aux2_ref, onehot, valid)
    per_row = ce_main + aux_weight * (ce_a1 + ce_a2)             # (tb,1) f32

    acc_ref[...] += jnp.sum(per_row, axis=0, keepdims=True)

    @pl.when(i == pl.num_programs(1) - 1)
    def _finalize():
        out_ref[...] = acc_ref[...].reshape(out_ref.shape)       # per-core partial


# ---------------------------------------------------------------------------
# wrapper
# ---------------------------------------------------------------------------
def _vmem_limit_bytes():
    """~half the chip's physical VMEM: 64 MiB on v5e/v6e, 32 MiB on v7x."""
    try:
        phys = pltpu.get_tpu_info().vmem_capacity_bytes
    except Exception:
        phys = 128 * 1024 * 1024
    return max(16 * 1024 * 1024, min(phys // 2, 64 * 1024 * 1024))


def _pick_tile_b(batch, n_classes, n_tensors, itemsize, vmem_budget, tile_b=None):
    """Batch tile sized to ~55% of the VMEM budget, dtype-packed alignment."""
    align = 8 if itemsize >= 4 else (16 if itemsize == 2 else 32)
    if tile_b is not None:
        if tile_b >= batch:
            return batch
        if tile_b % 8:
            raise ValueError("tile_b must be a multiple of 8 (sublane tiling)")
        return tile_b
    compute_item = itemsize if itemsize == 2 else 4
    bytes_per_row = (n_tensors * 2 * n_classes * itemsize        # 2x-buffered logits
                     + 8                                         # 2x-buffered labels
                     + 3 * n_classes * compute_item              # sub/exp/select temps
                     + n_classes * 4)                            # int32 iota / one-hot
    cap = int(0.55 * vmem_budget) // max(bytes_per_row, 1)
    cap = max(align, min((cap // align) * align, 4096))
    return batch if batch <= cap else cap


def _ce_pallas_call(kernel, logit_arrays, tgt2d, tile_b, vmem_limit):
    b = tgt2d.shape[0]
    c = logit_arrays[0].shape[1]
    n = len(logit_arrays)
    itemsize = int(logit_arrays[0].dtype.itemsize)

    nb = pl.cdiv(b, tile_b)              # total row-blocks
    inner = pl.cdiv(nb, 2)               # row-blocks per core
    grid = (2, inner)                    # (core-parallel, reduction)

    def row_map(p, i):
        # Clamp so the second core's dummy trailing blocks re-read a valid
        # block; their rows fail the in-kernel `row < total_b` mask and add 0.
        return (jnp.minimum(p * inner + i, nb - 1), 0)

    logit_spec = pl.BlockSpec((tile_b, c), row_map)
    tgt_spec = pl.BlockSpec((tile_b, 1), row_map)

    partials = pl.pallas_call(
        kernel,
        out_shape=jax.ShapeDtypeStruct((2, 1, 1), jnp.float32),
        grid=grid,
        in_specs=[logit_spec] * n + [tgt_spec],
        out_specs=pl.BlockSpec((1, 1, 1), lambda p, i: (p, 0, 0)),
        scratch_shapes=[pltpu.VMEM((1, 1), jnp.float32)],
        compiler_params=pltpu.CompilerParams(
            dimension_semantics=("parallel", "arbitrary"),
            vmem_limit_bytes=vmem_limit),
        cost_estimate=pl.CostEstimate(
            flops=int(7 * n * b * c),
            transcendentals=int(n * (b * c + b)),
            bytes_accessed=int(n * b * c * itemsize + b * 4 + 8)),
    )(*logit_arrays, tgt2d)
    return jnp.sum(partials) * (1.0 / b)


def inception_loss(outputs, labels, phase="eval", *, aux_weight=0.3, tile_b=None):
    """Pallas implementation of InceptionLoss.forward (nn.CrossEntropyLoss defaults)."""
    vmem_limit = _vmem_limit_bytes()
    if phase == "eval":
        logits = outputs
        b, c = logits.shape
        tgt2d = labels.astype(jnp.int32).reshape(b, 1)
        tb = _pick_tile_b(b, c, 1, int(logits.dtype.itemsize), vmem_limit, tile_b)
        kernel = functools.partial(_ce_eval_kernel, total_b=b, tile_b=tb)
        return _ce_pallas_call(kernel, [logits], tgt2d, tb, vmem_limit)

    aux1, aux2, main = outputs
    b, c = main.shape
    tgt2d = labels.astype(jnp.int32).reshape(b, 1)
    tb = _pick_tile_b(b, c, 3, int(main.dtype.itemsize), vmem_limit, tile_b)
    kernel = functools.partial(_inception_train_kernel, total_b=b, tile_b=tb,
                               aux_weight=float(aux_weight))
    return _ce_pallas_call(kernel, [aux1, aux2, main], tgt2d, tb, vmem_limit)


# ---------------------------------------------------------------------------
# pure-JAX references (correctness check)
# ---------------------------------------------------------------------------
def _ref_ce(logits, labels):
    logp = jax.nn.log_softmax(logits.astype(jnp.float32), axis=1)
    return -jnp.take_along_axis(logp, labels[:, None], axis=1).mean()


def _ref_inception(aux1, aux2, main, labels, aux_weight=0.3):
    return _ref_ce(main, labels) + aux_weight * (_ref_ce(aux1, labels) +
                                                 _ref_ce(aux2, labels))


if __name__ == "__main__":
    key = jax.random.PRNGKey(0)
    ks = jax.random.split(key, 10)

    # ---- eval phase, f32, single block (grid (2,1), core-1 blocks masked) --
    B, C = 8, 16
    logits = jax.random.normal(ks[0], (B, C), dtype=jnp.float32)
    labels = jax.random.randint(ks[1], (B,), 0, C, dtype=jnp.int32)
    got = jax.block_until_ready(inception_loss(logits, labels, phase="eval"))
    want = _ref_ce(logits, labels)
    assert jnp.allclose(got, want, rtol=1e-5, atol=1e-5), (got, want)

    # ---- eval phase, f32, multi-block per core (B=40, tile_b=8 -> nb=5) ----
    B, C = 40, 32
    logits = jax.random.normal(ks[8], (B, C), dtype=jnp.float32)
    labels = jax.random.randint(ks[9], (B,), 0, C, dtype=jnp.int32)
    got = jax.block_until_ready(
        inception_loss(logits, labels, phase="eval", tile_b=8))
    want = _ref_ce(logits, labels)
    assert jnp.allclose(got, want, rtol=1e-5, atol=1e-5), (got, want)

    # ---- train phase, f32, ragged batch vs tile (B=20, tile_b=8) -----------
    B, C = 20, 16
    a1 = jax.random.normal(ks[2], (B, C), dtype=jnp.float32)
    a2 = jax.random.normal(ks[3], (B, C), dtype=jnp.float32)
    mn = jax.random.normal(ks[4], (B, C), dtype=jnp.float32)
    labels = jax.random.randint(ks[5], (B,), 0, C, dtype=jnp.int32)
    got = jax.block_until_ready(
        inception_loss((a1, a2, mn), labels, phase="train", tile_b=8))
    want = _ref_inception(a1, a2, mn, labels)
    assert jnp.allclose(got, want, rtol=1e-5, atol=1e-5), (got, want)

    # ---- train phase, bf16 logits kept bf16 through exp (looser tol) -------
    B, C = 16, 128
    a1 = jax.random.normal(ks[6], (B, C), dtype=jnp.float32).astype(jnp.bfloat16)
    a2 = jax.random.normal(ks[7], (B, C), dtype=jnp.float32).astype(jnp.bfloat16)
    mn = (a1.astype(jnp.float32) * 0.5 + 0.25).astype(jnp.bfloat16)
    labels = jax.random.randint(ks[1], (B,), 0, C, dtype=jnp.int32)
    got = jax.block_until_ready(
        inception_loss((a1, a2, mn), labels, phase="train"))
    want = _ref_inception(a1, a2, mn, labels)
    assert jnp.allclose(got, want, rtol=2e-2, atol=2e-2), (got, want)

    print("KERNEL_OK")
</pallas_src>

<mosaic_0001>
module attributes {stable_mosaic.version = 11 : i64} {
  func.func @_ce_eval_kernel(%arg0: i32, %arg1: i32, %arg2: memref<8x16xf32, #tpu.memory_space<vmem>>, %arg3: memref<8x1xi32, #tpu.memory_space<vmem>>, %arg4: memref<1x1x1xf32, #tpu.memory_space<vmem>>, %arg5: memref<1x1xf32, #tpu.memory_space<vmem>>) attributes {dimension_semantics = [#tpu.dimension_semantics<parallel>, #tpu.dimension_semantics<arbitrary>], iteration_bounds = array<i64: 2, 1>, scalar_prefetch = 0 : i64, scratch_operands = 1 : i64, tpu.core_type = #tpu.core_type<tc>, window_params = [{transform_indices = @transform_0, window_bounds = array<i64: 8, 16>}, {transform_indices = @transform_1, window_bounds = array<i64: 8, 1>}, {transform_indices = @transform_2, window_bounds = array<i64: 1, 1, 1>}]} {
    %c1_i32 = arith.constant 1 : i32
    %0 = arith.muli %arg0, %c1_i32 : i32
    %1 = arith.addi %0, %arg1 : i32
    %c0_i32 = arith.constant 0 : i32
    %2 = arith.cmpi eq, %arg1, %c0_i32 : i32
    %3 = arith.extui %2 : i1 to i32
    %c0_i32_0 = arith.constant 0 : i32
    %4 = arith.cmpi ne, %3, %c0_i32_0 : i32
    scf.if %4 {
      %cst_16 = arith.constant 0.000000e+00 : f32
      %41 = vector.broadcast %cst_16 : f32 to vector<1x1xf32>
      %c0_17 = arith.constant 0 : index
      %c0_18 = arith.constant 0 : index
      %42 = vector.load %arg5[%c0_17, %c0_18] : memref<1x1xf32, #tpu.memory_space<vmem>>, vector<1x1xf32>
      tpu.vector_store %arg5[%c0_17, %c0_18], %41 {strides = array<i32>} : memref<1x1xf32, #tpu.memory_space<vmem>>, vector<1x1xf32>,
    } else {
    }
    %c0 = arith.constant 0 : index
    %c0_1 = arith.constant 0 : index
    %5 = vector.load %arg3[%c0, %c0_1] : memref<8x1xi32, #tpu.memory_space<vmem>>, vector<8x1xi32>
    %6 = tpu.iota {dimensions = array<i32: 1>} : vector<8x16xi32>
    %7 = vector.broadcast %5 : vector<8x1xi32> to vector<8x16xi32>
    %8 = arith.cmpi eq, %6, %7 : vector<8x16xi32>
    %9 = tpu.iota {dimensions = array<i32: 0>} : vector<8x1xi32>
    %c8_i32 = arith.constant 8 : i32
    %10 = arith.muli %1, %c8_i32 : i32
    %11 = vector.broadcast %10 : i32 to vector<8x1xi32>
    %12 = arith.addi %9, %11 : vector<8x1xi32>
    %c8_i32_2 = arith.constant 8 : i32
    %13 = vector.broadcast %c8_i32_2 : i32 to vector<8x1xi32>
    %14 = arith.cmpi slt, %12, %13 : vector<8x1xi32>
    %c0_3 = arith.constant 0 : index
    %c0_4 = arith.constant 0 : index
    %15 = vector.load %arg2[%c0_3, %c0_4] : memref<8x16xf32, #tpu.memory_space<vmem>>, vector<8x16xf32>
    %cst = arith.constant dense<0xFF800000> : vector<8xf32>
    %16 = vector.multi_reduction <maximumf>, %15, %cst [1] : vector<8x16xf32> to vector<8xf32>
    %17 = vector.shape_cast %16 : vector<8xf32> to vector<8x1xf32>
    %18 = vector.broadcast %17 : vector<8x1xf32> to vector<8x16xf32>
    %19 = arith.subf %15, %18 : vector<8x16xf32>
    %20 = math.exp %19 : vector<8x16xf32>
    %cst_5 = arith.constant dense<0.000000e+00> : vector<8xf32>
    %21 = vector.multi_reduction <add>, %20, %cst_5 [1] : vector<8x16xf32> to vector<8xf32>
    %22 = vector.shape_cast %21 : vector<8xf32> to vector<8x1xf32>
    %23 = math.log %22 : vector<8x1xf32>
    %24 = arith.addf %17, %23 : vector<8x1xf32>
    %c0_i32_6 = arith.constant 0 : i32
    %25 = arith.sitofp %c0_i32_6 : i32 to f32
    %26 = vector.broadcast %25 : f32 to vector<8x16xf32>
    %27 = arith.select %8, %15, %26 : vector<8x16xi1>, vector<8x16xf32>
    %cst_7 = arith.constant dense<0.000000e+00> : vector<8xf32>
    %28 = vector.multi_reduction <add>, %27, %cst_7 [1] : vector<8x16xf32> to vector<8xf32>
    %29 = vector.shape_cast %28 : vector<8xf32> to vector<8x1xf32>
    %30 = arith.subf %24, %29 : vector<8x1xf32>
    %cst_8 = arith.constant 0.000000e+00 : f32
    %31 = vector.broadcast %cst_8 : f32 to vector<8x1xf32>
    %32 = arith.select %14, %30, %31 : vector<8x1xi1>, vector<8x1xf32>
    %c0_9 = arith.constant 0 : index
    %c0_10 = arith.constant 0 : index
    %33 = vector.load %arg5[%c0_9, %c0_10] : memref<1x1xf32, #tpu.memory_space<vmem>>, vector<1x1xf32>
    %cst_11 = arith.constant dense<0.000000e+00> : vector<1xf32>
    %34 = vector.multi_reduction <add>, %32, %cst_11 [0] : vector<8x1xf32> to vector<1xf32>
    %35 = vector.shape_cast %34 : vector<1xf32> to vector<1x1xf32>
    %36 = arith.addf %33, %35 : vector<1x1xf32>
    %c0_12 = arith.constant 0 : index
    %c0_13 = arith.constant 0 : index
    %37 = vector.load %arg5[%c0_12, %c0_13] : memref<1x1xf32, #tpu.memory_space<vmem>>, vector<1x1xf32>
    tpu.vector_store %arg5[%c0_12, %c0_13], %36 {strides = array<i32>} : memref<1x1xf32, #tpu.memory_space<vmem>>, vector<1x1xf32>,
    %c0_i32_14 = arith.constant 0 : i32
    %38 = arith.cmpi eq, %arg1, %c0_i32_14 : i32
    %39 = arith.extui %38 : i1 to i32
    %c0_i32_15 = arith.constant 0 : i32
    %40 = arith.cmpi ne, %39, %c0_i32_15 : i32
    scf.if %40 {
      %c0_16 = arith.constant 0 : index
      %c0_17 = arith.constant 0 : index
      %41 = vector.load %arg5[%c0_16, %c0_17] : memref<1x1xf32, #tpu.memory_space<vmem>>, vector<1x1xf32>
      %42 = vector.shape_cast %41 : vector<1x1xf32> to vector<1x1x1xf32>
      %c0_18 = arith.constant 0 : index
      %c0_19 = arith.constant 0 : index
      %c0_20 = arith.constant 0 : index
      %43 = vector.load %arg4[%c0_18, %c0_19, %c0_20] : memref<1x1x1xf32, #tpu.memory_space<vmem>>, vector<1x1x1xf32>
      tpu.vector_store %arg4[%c0_18, %c0_19, %c0_20], %42 {strides = array<i32>} : memref<1x1x1xf32, #tpu.memory_space<vmem>>, vector<1x1x1xf32>,
    } else {
    }
    return
  }
  func.func @transform_0(%arg0: i32, %arg1: i32) -> (i32, i32) {
    %c1_i32 = arith.constant 1 : i32
    %0 = arith.muli %arg0, %c1_i32 : i32
    %1 = arith.addi %0, %arg1 : i32
    %c0_i32 = arith.constant 0 : i32
    %2 = arith.minsi %1, %c0_i32 : i32
    %c0_i32_0 = arith.constant 0 : i32
    %c0_i32_1 = arith.constant 0 : i32
    return %2, %c0_i32_0 : i32, i32
  }
  func.func @transform_1(%arg0: i32, %arg1: i32) -> (i32, i32) {
    %c1_i32 = arith.constant 1 : i32
    %0 = arith.muli %arg0, %c1_i32 : i32
    %1 = arith.addi %0, %arg1 : i32
    %c0_i32 = arith.constant 0 : i32
    %2 = arith.minsi %1, %c0_i32 : i32
    %c0_i32_0 = arith.constant 0 : i32
    %c0_i32_1 = arith.constant 0 : i32
    return %2, %c0_i32_0 : i32, i32
  }
  func.func @transform_2(%arg0: i32, %arg1: i32) -> (i32, i32, i32) {
    %c0_i32 = arith.constant 0 : i32
    %c0_i32_0 = arith.constant 0 : i32
    %c0_i32_1 = arith.constant 0 : i32
    return %arg0, %c0_i32, %c0_i32_0 : i32, i32, i32
  }
}

</mosaic_0001>

<llo_original>
// kernel: tpu_custom_call.1
$region0: #{tpu_custom_call.1}
  #allocation0 [shape = 'u32[]', space=smem, size = 0x4, offset = 0x4, fixed_abs, tag = 'smem constant byte address 0x4 - core index']
  #allocation1 [shape = 'u32[144,128]{1,0:T(1,128)}', space=vmem, size = 0x12000, scoped, tag = 'internal scratch']
  #allocation2 [shape = 'f32[1,1]{1,0:T(1,128)}', space=vmem, size = 0x200, scoped, tag = 'scratch operand']
  %s0 = inlined_call_operand.hbm [shape: f32[8,16], index: 0, kind: input, shape index: {}]
  %s1 = inlined_call_operand.hbm [shape: s32[8,1], index: 1, kind: input, shape index: {}]
  %s2 = inlined_call_operand.hbm [shape: f32[2,1,1], index: 2, kind: output, shape index: {}]
  %s3 = sld [smem:[#allocation0]]
  $region57: #{tpu_custom_call.1} parent=0
    _
  %s5 = ssub.s32 1, %s3
  %s6 = scalar_select 0, %s5, %s3
  $region1: #{tpu_custom_call.1} parent=0
    #allocation3 [shape = 'u8[8192]{0}', space=vmem, size = 0x2000, scoped, tag = 'input window, operand 0']
    #allocation4 [shape = 's32[2]{0}', space=sflag, size = 0x8, scoped, tag = 'scoped memory for tpu_custom_call.1']
    #allocation5 [shape = 's32[2]{0}', space=sflag, size = 0x8, scoped, tag = 'scoped memory for tpu_custom_call.1']
    #allocation6 [shape = 'u8[8192]{0}', space=vmem, size = 0x2000, scoped, tag = 'input window, operand 1']
    #allocation7 [shape = 's32[2]{0}', space=sflag, size = 0x8, scoped, tag = 'scoped memory for tpu_custom_call.1']
    #allocation8 [shape = 'u8[1024]{0}', space=vmem, size = 0x400, scoped, tag = 'output window, operand 0']
    %7 = vsyncpa [#allocation4], 0
    %s8 = scalar_lea.sflag [#allocation4], 1
    %9 = vsyncpa %s8, 0
    %10 = vsyncpa [#allocation7], 0
    %s11 = scalar_lea.sflag [#allocation7], 1
    %12 = vsyncpa %s11, 0
    %13 = vsyncpa [#allocation5], 0
    %s14 = scalar_lea.sflag [#allocation5], 1
    %15 = vsyncpa %s14, 0
    loop: start=0, step=1, limit=4
    $region2: #{tpu_custom_call.1} parent=1 // loop_pre_header
      _
    $region3: #{tpu_custom_call.1} parent=1 // loop_header
      %s17 = sphi 0, %s21
      %p18 = scmp.ge.s32.totalorder %s17, 4
      %s24 = sphi 0, %s36
      %s25 = sphi 0, %s32
      %s26 = sphi 0, %s24
      %s27 = sphi 0, %s25
      %s28 = sphi 0, %s26
      %s29 = sphi 0, %s27
      %s45 = sphi 0, %s47
      %s48 = sphi 0, %s45
      %s49 = sphi 0, %s48
      %s65 = sphi 0, %s49
      %s77 = sphi 0, %s79
      %s80 = sphi 0, %s77
      %s81 = sphi 0, %s80
      %s97 = sphi 0, %s81
      %s103 = sphi 0, %s105
      %s106 = sphi 0, %s103
      %s107 = sphi 0, %s106
      %s123 = sphi 0, %s107
    $region4: #{tpu_custom_call.1} parent=1 // loop_header_branch
      %20 = sbr.rel (%p18) target = $region8
    $region5: #{tpu_custom_call.1} parent=1 // loop_body
      %s22 = ssub.s32 %s17, 1
      %s23 = ssub.s32 %s17, 2
      %s30 = sadd.s32 1, %s25
      %p31 = scmp.ge.s32.totalorder %s30, 1
      %s32 = scalar_select %p31, 0, %s30
      %s33 = sadd.s32 1, %s24
      %s34 = scalar_select %p31, %s33, %s24
      %p35 = scmp.ge.s32.totalorder %s34, 2
      %s36 = scalar_select %p35, 0, %s34
      %s37 = sadd.s32 %s24, %s25
      %p38 = scmp.lt.s32.totalorder %s37, 0
      %s39 = scalar_select %p38, %s37, 0
      %s40 = sadd.s32 %s36, %s32
      %p41 = scmp.lt.s32.totalorder %s40, 0
      %s42 = scalar_select %p41, %s40, 0
      %s43 = ssub.s32 %s39, %s42
      %p44 = scmp.eq.s32.totalorder %s43, 0
      %s46 = sadd.s32 %s45, 1
      %s47 = scalar_select %p44, %s45, %s46
      %p50 = pneg %p44
      %p51 = scmp.eq.s32.totalorder %s17, 1
      %p52 = por %p50, %p51
      %p53 = scmp.ne.s32.totalorder %s45, %s48
      %p54 = scmp.eq.s32.totalorder %s17, 0
      %p55 = por %p53, %p54
      %p56 = scmp.ne.s32.totalorder %s45, %s48
      %p57 = scmp.eq.s32.totalorder %s22, 1
      %p58 = por %p56, %p57
      %p59 = scmp.ne.s32.totalorder %s48, %s49
      %p60 = scmp.eq.s32.totalorder %s22, 0
      %p61 = por %p59, %p60
      %p62 = scmp.ne.s32.totalorder %s48, %s49
      %p63 = scmp.eq.s32.totalorder %s23, 1
      %p64 = por %p62, %p63
      %p66 = scmp.ne.s32.totalorder %s49, %s65
      %p67 = scmp.eq.s32.totalorder %s23, 0
      %p68 = por %p66, %p67
      %s69 = sadd.s32 %s24, %s25
      %p70 = scmp.lt.s32.totalorder %s69, 0
      %s71 = scalar_select %p70, %s69, 0
      %s72 = sadd.s32 %s36, %s32
      %p73 = scmp.lt.s32.totalorder %s72, 0
      %s74 = scalar_select %p73, %s72, 0
      %s75 = ssub.s32 %s71, %s74
      %p76 = scmp.eq.s32.totalorder %s75, 0
      %s78 = sadd.s32 %s77, 1
      %s79 = scalar_select %p76, %s77, %s78
      %p82 = pneg %p76
      %p83 = scmp.eq.s32.totalorder %s17, 1
      %p84 = por %p82, %p83
      %p85 = scmp.ne.s32.totalorder %s77, %s80
      %p86 = scmp.eq.s32.totalorder %s17, 0
      %p87 = por %p85, %p86
      %p88 = scmp.ne.s32.totalorder %s77, %s80
      %p89 = scmp.eq.s32.totalorder %s22, 1
      %p90 = por %p88, %p89
      %p91 = scmp.ne.s32.totalorder %s80, %s81
      %p92 = scmp.eq.s32.totalorder %s22, 0
      %p93 = por %p91, %p92
      %p94 = scmp.ne.s32.totalorder %s80, %s81
      %p95 = scmp.eq.s32.totalorder %s23, 1
      %p96 = por %p94, %p95
      %p98 = scmp.ne.s32.totalorder %s81, %s97
      %p99 = scmp.eq.s32.totalorder %s23, 0
      %p100 = por %p98, %p99
      %s101 = ssub.s32 %s24, %s36
      %p102 = scmp.eq.s32.totalorder %s101, 0
      %s104 = sadd.s32 %s103, 1
      %s105 = scalar_select %p102, %s103, %s104
      %p108 = pneg %p102
      %p109 = scmp.eq.s32.totalorder %s17, 1
      %p110 = por %p108, %p109
      %p111 = scmp.ne.s32.totalorder %s103, %s106
      %p112 = scmp.eq.s32.totalorder %s17, 0
      %p113 = por %p111, %p112
      %p114 = scmp.ne.s32.totalorder %s103, %s106
      %p115 = scmp.eq.s32.totalorder %s22, 1
      %p116 = por %p114, %p115
      %p117 = scmp.ne.s32.totalorder %s106, %s107
      %p118 = scmp.eq.s32.totalorder %s22, 0
      %p119 = por %p117, %p118
      %p120 = scmp.ne.s32.totalorder %s106, %s107
      %p121 = scmp.eq.s32.totalorder %s23, 1
      %p122 = por %p120, %p121
      %p124 = scmp.ne.s32.totalorder %s107, %s123
      %p125 = scmp.eq.s32.totalorder %s23, 0
      %p126 = por %p124, %p125
      %p127 = scmp.le.s32.totalorder 1, %s17
      %p128 = scmp.lt.s32.totalorder %s17, 3
      %p129 = pnand %p127, %p128
      %p130 = pneg %p129
      // Predicated region
      $region9: #{tpu_custom_call.1} parent=5 // pred_check
        _
      $region10: #{tpu_custom_call.1} parent=5 // pred_check_branch
        %132 = sbr.rel (%p129) target = $region12
      $region11: #{tpu_custom_call.1} parent=5 // pred_region
        %s133 = ssub.s32 %s17, 1
      $region12: #{tpu_custom_call.1} parent=5 // pred_fallthru
        _
      %p134 = scmp.lt.s32.totalorder %s17, 2
      // Predicated region
      $region13: #{tpu_custom_call.1} parent=5 // pred_check
        %p135 = pneg %p134
      $region14: #{tpu_custom_call.1} parent=5 // pred_check_branch
        %137 = sbr.rel (%p135) target = $region16
      $region15: #{tpu_custom_call.1} parent=5 // pred_region
        // Predicated region
        $region17: #{tpu_custom_call.1} parent=15 // pred_check
          %p138 = pneg %p55
        $region18: #{tpu_custom_call.1} parent=15 // pred_check_branch
          %140 = sbr.rel (%p138) target = $region20
        $region19: #{tpu_custom_call.1} parent=15 // pred_region
          %s141 = sand.u32 %s45, 1
          %s142 = scalar_lea.sflag [#allocation4], %s141
          %s143 = sand.u32 %s45, 1
          %s144 = smul.addr %s143, 8
          %s145 = scalar_lea.vmem [#allocation3], %s144
          %s146 = sadd.s32 %s24, %s25
          %p147 = scmp.lt.s32.totalorder %s146, 0
          %s148 = scalar_select %p147, %s146, 0
          %s150 = ssub.s32 128, 128
          %151 = vsyncadd %s142, %s150
          %s152 = smul.addr %s148, 128
          %s153 = scalar_lea.hbm %s0, %s152
          %s155 = sshll.u32 %s145, 4
          %s156 = int_to_ptr.vmem [resolvable:$true] %s155
          %158 = dma.hbm_to_vmem [thread:$0]  %s153, 128, %s156, %s142
        $region20: #{tpu_custom_call.1} parent=15 // pred_fallthru
          _
        // Predicated region
        $region21: #{tpu_custom_call.1} parent=15 // pred_check
          %p159 = pneg %p87
        $region22: #{tpu_custom_call.1} parent=15 // pred_check_branch
          %161 = sbr.rel (%p159) target = $region24
        $region23: #{tpu_custom_call.1} parent=15 // pred_region
          %s162 = sand.u32 %s77, 1
          %s163 = scalar_lea.sflag [#allocation7], %s162
          %s164 = sand.u32 %s77, 1
          %s165 = smul.addr %s164, 8
          %s166 = scalar_lea.vmem [#allocation6], %s165
          %s167 = sadd.s32 %s24, %s25
          %p168 = scmp.lt.s32.totalorder %s167, 0
          %s169 = scalar_select %p168, %s167, 0
          %s171 = ssub.s32 128, 128
          %172 = vsyncadd %s163, %s171
          %s173 = smul.addr %s169, 128
          %s174 = scalar_lea.hbm %s1, %s173
          %s176 = sshll.u32 %s166, 4
          %s177 = int_to_ptr.vmem [resolvable:$true] %s176
          %179 = dma.hbm_to_vmem [thread:$0]  %s174, 128, %s177, %s163
        $region24: #{tpu_custom_call.1} parent=15 // pred_fallthru
          _
      $region16: #{tpu_custom_call.1} parent=5 // pred_fallthru
        _
      %p180 = scmp.le.s32.totalorder 1, %s17
      %p181 = scmp.lt.s32.totalorder %s17, 3
      %p182 = pnand %p180, %p181
      %p183 = pneg %p182
      // Predicated region
      $region25: #{tpu_custom_call.1} parent=5 // pred_check
        _
      $region26: #{tpu_custom_call.1} parent=5 // pred_check_branch
        %185 = sbr.rel (%p182) target = $region28
      $region27: #{tpu_custom_call.1} parent=5 // pred_region
        %s186 = ssub.s32 %s17, 1
        %s187 = sand.u32 %s48, 1
        %s188 = scalar_lea.sflag [#allocation4], %s187
        %s189 = sand.u32 %s48, 1
        %s190 = smul.addr %s189, 8
        %s191 = scalar_lea.vmem [#allocation3], %s190
        // Predicated region
        $region29: #{tpu_custom_call.1} parent=27 // pred_check
          %p192 = pneg %p61
        $region30: #{tpu_custom_call.1} parent=27 // pred_check_branch
          %194 = sbr.rel (%p192) target = $region32
        $region31: #{tpu_custom_call.1} parent=27 // pred_region
          %195 = dma.done %s188, 128
        $region32: #{tpu_custom_call.1} parent=27 // pred_fallthru
          _
        %s196 = sand.u32 %s80, 1
        %s197 = scalar_lea.sflag [#allocation7], %s196
        %s198 = sand.u32 %s80, 1
        %s199 = smul.addr %s198, 8
        %s200 = scalar_lea.vmem [#allocation6], %s199
        // Predicated region
        $region33: #{tpu_custom_call.1} parent=27 // pred_check
          %p201 = pneg %p93
        $region34: #{tpu_custom_call.1} parent=27 // pred_check_branch
          %203 = sbr.rel (%p201) target = $region36
        $region35: #{tpu_custom_call.1} parent=27 // pred_region
          %204 = dma.done %s197, 128
        $region36: #{tpu_custom_call.1} parent=27 // pred_fallthru
          _
        %s205 = sand.u32 %s48, 1
        %s206 = scalar_lea.sflag [#allocation4], %s205
        %s207 = sand.u32 %s48, 1
        %s208 = smul.addr %s207, 8
        %s209 = scalar_lea.vmem [#allocation3], %s208
        %p210 = pneg %p61
        %p211 = pneg %p58
        %s212 = sand.u32 %s80, 1
        %s213 = scalar_lea.sflag [#allocation7], %s212
        %s214 = sand.u32 %s80, 1
        %s215 = smul.addr %s214, 8
        %s216 = scalar_lea.vmem [#allocation6], %s215
        %p217 = pneg %p93
        %p218 = pneg %p90
        %p219 = pneg %p119
        %p220 = pneg %p116
        %s221 = sand.u32 %s106, 1
        %s222 = scalar_lea.sflag [#allocation5], %s221
        %s223 = sand.u32 %s106, 1
        %s224 = scalar_lea.vmem [#allocation8], %s223
        %s225 = sadd.s32 %s26, %s27
        %p226 = scmp.lt.s32.totalorder %s225, 0
        %s227 = scalar_select %p226, %s225, 0
        %s228 = sadd.s32 %s26, %s27
        %p229 = scmp.lt.s32.totalorder %s228, 0
        %s230 = scalar_select %p229, %s228, 0
        %s231 = sadd.s32 %s26, %s27
        %p232 = scmp.eq.s32.totalorder %s27, 0
        // Predicated region
        $region37: #{tpu_custom_call.1} parent=27 // pred_check
          %p233 = pneg %p232
        $region38: #{tpu_custom_call.1} parent=27 // pred_check_branch
          %235 = sbr.rel (%p233) target = $region40
        $region39: #{tpu_custom_call.1} parent=27 // pred_region
          %vm236 = vcmask 0
          %237 = vst.msk [vmem:[#allocation2] sm:$0x1] %vm236, 0.0
        $region40: #{tpu_custom_call.1} parent=27 // pred_fallthru
          _
        %v238 = vld [vmem:[%s200] sm:$0xff]
        %v239 = vlaneseq
        %v240 = vand.u32 %v239, 127
        %241 = vset.pattern.permute.xlu0 0
        %242 = vperm.xlu0 %241, %v238
        %v243 = vpop.permute.xlu0 %242
        %vm244 = vcmp.eq.s32.totalorder %v240, %v243
        %v245 = vlaneseq
        %v246 = vshrl.u32 %v245, 7
        %s247 = smul.u32 %s231, 8
        %v248 = vstv %s247
        %v249 = vadd.s32 %v246, %v248
        %vm250 = vcmp.lt.s32.totalorder %v249, 8
        %v251 = vld [vmem:[%s191] sm:$0xff]
        %vm252 = vcmask 130048
        %v253 = vsel %vm252, %v251, -inf
        %254 = vmax.xlane.f32.xlu0 %v253
        %v255 = vpop.xlane.xlu0 %254
        %v256 = vsub.f32 %v251, %v255
        %v257 = vmul.f32 %v256, 1.442695
        %v258 = vpow.pop %v257
        %v259 = vsel %vm252, %v258, 0.0
        %260 = vadd.xlane.f32.xlu0 %v259
        %v261 = vpop.xlane.xlu0 %260
        %v262 = vlog2.pop %v261
        %v263 = vmul.f32 %v262, 0.6931472
        %v264 = vadd.f32 %v255, %v263
        %v265 = vsel %vm244, %v251, 0.0
        %v266 = vsel %vm252, %v265, 0.0
        %267 = vadd.xlane.f32.xlu0 %v266
        %v268 = vpop.xlane.xlu0 %267
        %v269 = vsub.f32 %v264, %v268
        %v270 = vsel %vm250, %v269, 0.0
        %v271 = vld [vmem:[#allocation2] sm:$0x1]
        %v272 = vrot.slane %v270, 4
        %v273 = vadd.f32 %v270, %v272
        %v274 = vrot.slane %v273, 2
        %v275 = vadd.f32 %v273, %v274
        %v276 = vrot.slane %v275, 1
        %v277 = vadd.f32 %v275, %v276
        %v278 = vadd.f32 %v271, %v277
        %vm279 = vcmask 0
        %280 = vst.msk [vmem:[#allocation2] sm:$0x1] %vm279, %v278
        // Predicated region
        $region41: #{tpu_custom_call.1} parent=27 // pred_check
          %p281 = pneg %p232
        $region42: #{tpu_custom_call.1} parent=27 // pred_check_branch
          %283 = sbr.rel (%p281) target = $region44
        $region43: #{tpu_custom_call.1} parent=27 // pred_region
          %v284 = vld [vmem:[#allocation2] sm:$0x1]
          %285 = vst.msk [vmem:[%s224] sm:$0x1] %vm279, %v284
        $region44: #{tpu_custom_call.1} parent=27 // pred_fallthru
          _
        %s286 = sand.u32 %s106, 1
        %s287 = scalar_lea.sflag [#allocation5], %s286
        %s288 = sand.u32 %s106, 1
        %s289 = scalar_lea.vmem [#allocation8], %s288
        // Predicated region
        $region45: #{tpu_custom_call.1} parent=27 // pred_check
          %p290 = pneg %p116
        $region46: #{tpu_custom_call.1} parent=27 // pred_check_branch
          %292 = sbr.rel (%p290) target = $region48
        $region47: #{tpu_custom_call.1} parent=27 // pred_region
          %s294 = ssub.s32 16, 16
          %295 = vsyncadd %s287, %s294
          %s296 = smul.addr %s26, 16
          %s297 = scalar_lea.hbm %s2, %s296
          %s299 = sshll.u32 %s289, 4
          %s300 = int_to_ptr.vmem [resolvable:$true] %s299
          %302 = dma.vmem_to_hbm [thread:$0]  %s300, 16, %s297, %s287
        $region48: #{tpu_custom_call.1} parent=27 // pred_fallthru
          _
      $region28: #{tpu_custom_call.1} parent=5 // pred_fallthru
        _
      %p303 = scmp.le.s32.totalorder 2, %s17
      // Predicated region
      $region49: #{tpu_custom_call.1} parent=5 // pred_check
        %p304 = pneg %p303
      $region50: #{tpu_custom_call.1} parent=5 // pred_check_branch
        %306 = sbr.rel (%p304) target = $region52
      $region51: #{tpu_custom_call.1} parent=5 // pred_region
        %s307 = ssub.s32 %s17, 2
        // Predicated region
        $region53: #{tpu_custom_call.1} parent=51 // pred_check
          %p308 = pneg %p122
        $region54: #{tpu_custom_call.1} parent=51 // pred_check_branch
          %310 = sbr.rel (%p308) target = $region56
        $region55: #{tpu_custom_call.1} parent=51 // pred_region
          %s311 = sand.u32 %s107, 1
          %s312 = scalar_lea.sflag [#allocation5], %s311
          %s313 = sand.u32 %s107, 1
          %s314 = scalar_lea.vmem [#allocation8], %s313
          %315 = dma.done %s312, 16
        $region56: #{tpu_custom_call.1} parent=51 // pred_fallthru
          _
      $region52: #{tpu_custom_call.1} parent=5 // pred_fallthru
        _
    $region6: #{tpu_custom_call.1} parent=1 // loop_footer
      %s21 = sadd.s32 1, %s17
    $region7: #{tpu_custom_call.1} parent=1 // loop_footer_branch
      %16 = sbr.rel target = $region3
    $region8: #{tpu_custom_call.1} parent=1 // loop_exit
      _
    %316 = vsyncpa [#allocation4], 1
    %s317 = scalar_lea.sflag [#allocation4], 1
    %318 = vsyncpa %s317, 1
    %319 = vsyncpa [#allocation7], 1
    %s320 = scalar_lea.sflag [#allocation7], 1
    %321 = vsyncpa %s320, 1
    %322 = vsyncpa [#allocation5], 1
    %s323 = scalar_lea.sflag [#allocation5], 1
    %324 = vsyncpa %s323, 1

</llo_original>
